<compile_context>
chip_gen: v5e
topology: v5e:2x2
jax: 0.10.0
libtpu: 0.0.40
codegen_flags: <defaults>
</compile_context>

<pallas_src>
import functools

import jax
import jax.numpy as jnp
from jax.experimental import pallas as pl
from jax.experimental.pallas import tpu as pltpu


def _mlp_kernel(*refs, n_layers: int):
    """Fused MLP body.  refs = (x, w0, b0, w1, b1, ..., w_{L-1}, b_{L-1}, out)."""
    x_ref, o_ref = refs[0], refs[-1]
    wb = refs[1:-1]

    out = x_ref[...]                            # already in the compute dtype
    for li in range(n_layers):
        w = wb[2 * li][...]
        b = wb[2 * li + 1][...]                 # (1, out_features) f32 -> broadcast rows
        # Run the MXU natively in the weight dtype (no-op cast for layer 0 and
        # for the all-f32 path); always accumulate in f32.
        acc = jnp.dot(out.astype(w.dtype), w, preferred_element_type=jnp.float32)
        acc = acc + b
        if li != n_layers - 1:
            acc = jnp.maximum(acc, 0.0)         # ReLU on hidden layers only
        out = acc
    o_ref[...] = out.astype(o_ref.dtype)


_TILE_N = 1024   # max rows per tile: f32 x tile = 4 MiB, 2x buffered fits v5e's 16 MiB scoped VMEM
_SMALL_N = 256   # batches at or below this take the grid-less whole-array path


def _round_up(x, m):
    return (x + m - 1) // m * m


def q_learning_forward(x, params, in_channels, *, compute_dtype=jnp.bfloat16):
    """Pallas implementation of Q_learning.forward (fully fused MLP).

    compute_dtype: dtype used for streaming x and for the weight matrices
    (matmuls accumulate in f32, biases/output are f32).  Default bf16 halves
    the dominant x/weight HBM traffic; pass jnp.float32 for exact-ish Q-values.
    """
    xf = x.reshape(-1, in_channels).astype(compute_dtype)   # x.view(-1, C).float() [+ cast]
    n = xf.shape[0]
    n_layers = len(params)
    out_dim = params[-1][0].shape[1]

    # Flatten params; weights in compute dtype, biases as (1, out_features) f32 rows.
    flat = []
    for w, b in params:
        flat.append(w.astype(compute_dtype))
        flat.append(b.reshape(1, -1).astype(jnp.float32))

    kernel = functools.partial(_mlp_kernel, n_layers=n_layers)

    if n <= _SMALL_N:
        # Tiny batch: single invocation, whole arrays resident in VMEM,
        # no grid => no per-step pipeline bookkeeping or double buffering.
        vmem = pltpu.MemorySpace.VMEM
        return pl.pallas_call(
            kernel,
            out_shape=jax.ShapeDtypeStruct((n, out_dim), jnp.float32),
            in_specs=[pl.BlockSpec(memory_space=vmem)] * (1 + len(flat)),
            out_specs=pl.BlockSpec(memory_space=vmem),
        )(xf, *flat)

    # Pipelined tiled path for every other batch size.
    #   - grid always >= 2 so both v7x TensorCores get rows,
    #   - tile rows are a multiple of 8 (sublane constraint),
    #   - the batch is zero-padded to grid*tile rows and sliced after the call.
    n_tiles = max(2, pl.cdiv(n, _TILE_N))
    tile_n = _round_up(pl.cdiv(n, n_tiles), 8)
    n_pad = tile_n * n_tiles
    if n_pad != n:
        xf = jnp.pad(xf, ((0, n_pad - n), (0, 0)))

    in_specs = [pl.BlockSpec((tile_n, in_channels), lambda i: (i, 0))]
    for w2, b2 in zip(flat[0::2], flat[1::2]):
        # Constant block index -> weights/biases stay resident across the grid.
        in_specs.append(pl.BlockSpec(w2.shape, lambda i: (0, 0)))
        in_specs.append(pl.BlockSpec(b2.shape, lambda i: (0, 0)))

    # TODO(synk): if profiling ever shows the lane-sparse (tile_n, 4) vst.msk
    # store on the critical path, compute into a 128-wide padded block and
    # slice to out_dim outside; it is writeback noise at this roofline point.
    out = pl.pallas_call(
        kernel,
        out_shape=jax.ShapeDtypeStruct((n_pad, out_dim), jnp.float32),
        grid=(n_tiles,),
        in_specs=in_specs,
        out_specs=pl.BlockSpec((tile_n, out_dim), lambda i: (i, 0)),
        compiler_params=pltpu.CompilerParams(
            dimension_semantics=("parallel",)),
    )(xf, *flat)
    return out[:n] if n_pad != n else out


def init_q_learning_params(key, in_channels, hidden_layers, out_channels=4):
    """Deterministic synthetic init matching nn.Linear's default (fan_in) init.

    Weights are stored pre-transposed as (in_features, out_features).
    """
    params = []
    prev = in_channels
    for d in list(hidden_layers) + [out_channels]:
        key, kw, kb = jax.random.split(key, 3)
        bound = 1.0 / (float(prev) ** 0.5)
        w = jax.random.uniform(kw, (prev, d), jnp.float32, -bound, bound)
        b = jax.random.uniform(kb, (d,), jnp.float32, -bound, bound)
        params.append((w, b))
        prev = d
    return params


def q_learning_reference(x, params, in_channels):
    """Plain-JAX f32 reference for correctness checking."""
    out = x.reshape(-1, in_channels).astype(jnp.float32)
    n_layers = len(params)
    for li, (w, b) in enumerate(params):
        out = out @ w.astype(jnp.float32) + b.astype(jnp.float32)
        if li != n_layers - 1:
            out = jnp.maximum(out, 0.0)
    return out


if __name__ == "__main__":
    key = jax.random.PRNGKey(0)

    # NCHW input flattened to in_channels = C*H*W features per row.
    B, C, H, W = 2, 4, 16, 16
    in_channels = C * H * W            # 1024
    hidden_layers = [128, 32]
    out_channels = 4

    key, kx, kp = jax.random.split(key, 3)
    x = jax.random.normal(kx, (B, C, H, W), dtype=jnp.float32)
    params = init_q_learning_params(kp, in_channels, hidden_layers, out_channels)
    ref = q_learning_reference(x, params, in_channels)

    # 1) Small batch, f32 compute: grid-less fused kernel, exact semantics.
    out = jax.block_until_ready(
        q_learning_forward(x, params, in_channels, compute_dtype=jnp.float32))
    assert out.shape == (B, out_channels), out.shape
    assert jnp.allclose(out, ref, atol=1e-4, rtol=1e-4), (
        f"f32 mismatch: max abs err {jnp.max(jnp.abs(out - ref))}")

    # 2) Default path (bf16 x + weights, f32 accumulate), small batch.
    out_bf16 = jax.block_until_ready(q_learning_forward(x, params, in_channels))
    assert jnp.allclose(out_bf16, ref, atol=5e-2, rtol=5e-2), (
        f"bf16 mismatch: max abs err {jnp.max(jnp.abs(out_bf16 - ref))}")

    # 3) Replay-buffer-sized batch, f32: tiled/pipelined path (grid of 2 x 512).
    key, kx2 = jax.random.split(key)
    NB = 1024
    x_big = jax.random.normal(kx2, (NB, in_channels), dtype=jnp.float32)
    ref_big = q_learning_reference(x_big, params, in_channels)
    out_big = jax.block_until_ready(
        q_learning_forward(x_big, params, in_channels, compute_dtype=jnp.float32))
    assert out_big.shape == (NB, out_channels), out_big.shape
    assert jnp.allclose(out_big, ref_big, atol=1e-3, rtol=1e-3), (
        f"tiled f32 mismatch: max abs err {jnp.max(jnp.abs(out_big - ref_big))}")

    # 4) Non-multiple batch, default bf16: exercises the padded tiled path.
    key, kx3 = jax.random.split(key)
    NB2 = 1300
    x_odd = jax.random.normal(kx3, (NB2, in_channels), dtype=jnp.float32)
    ref_odd = q_learning_reference(x_odd, params, in_channels)
    out_odd = jax.block_until_ready(
        q_learning_forward(x_odd, params, in_channels))
    assert out_odd.shape == (NB2, out_channels), out_odd.shape
    assert jnp.allclose(out_odd, ref_odd, atol=5e-2, rtol=5e-2), (
        f"tiled bf16 mismatch: max abs err {jnp.max(jnp.abs(out_odd - ref_odd))}")

    print("KERNEL_OK")
</pallas_src>

<mosaic_0001>
module attributes {stable_mosaic.version = 11 : i64} {
  func.func @_mlp_kernel(%arg0: memref<2x1024xf32, #tpu.memory_space<vmem>>, %arg1: memref<1024x128xf32, #tpu.memory_space<vmem>>, %arg2: memref<1x128xf32, #tpu.memory_space<vmem>>, %arg3: memref<128x32xf32, #tpu.memory_space<vmem>>, %arg4: memref<1x32xf32, #tpu.memory_space<vmem>>, %arg5: memref<32x4xf32, #tpu.memory_space<vmem>>, %arg6: memref<1x4xf32, #tpu.memory_space<vmem>>, %arg7: memref<2x4xf32, #tpu.memory_space<vmem>>) attributes {dimension_semantics = [], scalar_prefetch = 0 : i64, scratch_operands = 0 : i64, tpu.core_type = #tpu.core_type<tc>} {
    %c0 = arith.constant 0 : index
    %c0_0 = arith.constant 0 : index
    %0 = vector.load %arg0[%c0, %c0_0] : memref<2x1024xf32, #tpu.memory_space<vmem>>, vector<2x1024xf32>
    %c0_1 = arith.constant 0 : index
    %c0_2 = arith.constant 0 : index
    %1 = vector.load %arg1[%c0_1, %c0_2] : memref<1024x128xf32, #tpu.memory_space<vmem>>, vector<1024x128xf32>
    %c0_3 = arith.constant 0 : index
    %c0_4 = arith.constant 0 : index
    %2 = vector.load %arg2[%c0_3, %c0_4] : memref<1x128xf32, #tpu.memory_space<vmem>>, vector<1x128xf32>
    %cst = arith.constant dense<0.000000e+00> : vector<2x128xf32>
    %3 = tpu.matmul %0, %1, %cst {dimension_numbers = #tpu.dot_dimension_numbers<[1], [0], [0], [1], [0, 0, 1, 1], [], []>} : vector<2x1024xf32>, vector<1024x128xf32>, vector<2x128xf32> -> vector<2x128xf32>
    %4 = vector.broadcast %2 : vector<1x128xf32> to vector<2x128xf32>
    %5 = arith.addf %3, %4 : vector<2x128xf32>
    %cst_5 = arith.constant 0.000000e+00 : f32
    %6 = vector.broadcast %cst_5 : f32 to vector<2x128xf32>
    %7 = arith.maximumf %5, %6 : vector<2x128xf32>
    %c0_6 = arith.constant 0 : index
    %c0_7 = arith.constant 0 : index
    %8 = vector.load %arg3[%c0_6, %c0_7] : memref<128x32xf32, #tpu.memory_space<vmem>>, vector<128x32xf32>
    %c0_8 = arith.constant 0 : index
    %c0_9 = arith.constant 0 : index
    %9 = vector.load %arg4[%c0_8, %c0_9] : memref<1x32xf32, #tpu.memory_space<vmem>>, vector<1x32xf32>
    %cst_10 = arith.constant dense<0.000000e+00> : vector<2x32xf32>
    %10 = tpu.matmul %7, %8, %cst_10 {dimension_numbers = #tpu.dot_dimension_numbers<[1], [0], [0], [1], [0, 0, 1, 1], [], []>} : vector<2x128xf32>, vector<128x32xf32>, vector<2x32xf32> -> vector<2x32xf32>
    %11 = vector.broadcast %9 : vector<1x32xf32> to vector<2x32xf32>
    %12 = arith.addf %10, %11 : vector<2x32xf32>
    %cst_11 = arith.constant 0.000000e+00 : f32
    %13 = vector.broadcast %cst_11 : f32 to vector<2x32xf32>
    %14 = arith.maximumf %12, %13 : vector<2x32xf32>
    %c0_12 = arith.constant 0 : index
    %c0_13 = arith.constant 0 : index
    %15 = vector.load %arg5[%c0_12, %c0_13] : memref<32x4xf32, #tpu.memory_space<vmem>>, vector<32x4xf32>
    %c0_14 = arith.constant 0 : index
    %c0_15 = arith.constant 0 : index
    %16 = vector.load %arg6[%c0_14, %c0_15] : memref<1x4xf32, #tpu.memory_space<vmem>>, vector<1x4xf32>
    %cst_16 = arith.constant dense<0.000000e+00> : vector<2x4xf32>
    %17 = tpu.matmul %14, %15, %cst_16 {dimension_numbers = #tpu.dot_dimension_numbers<[1], [0], [0], [1], [0, 0, 1, 1], [], []>} : vector<2x32xf32>, vector<32x4xf32>, vector<2x4xf32> -> vector<2x4xf32>
    %18 = vector.broadcast %16 : vector<1x4xf32> to vector<2x4xf32>
    %19 = arith.addf %17, %18 : vector<2x4xf32>
    %c0_17 = arith.constant 0 : index
    %c0_18 = arith.constant 0 : index
    %20 = vector.load %arg7[%c0_17, %c0_18] : memref<2x4xf32, #tpu.memory_space<vmem>>, vector<2x4xf32>
    tpu.vector_store %arg7[%c0_17, %c0_18], %19 {strides = array<i32>} : memref<2x4xf32, #tpu.memory_space<vmem>>, vector<2x4xf32>,
    return
  }
}

</mosaic_0001>

<llo_original>
// kernel: tpu_custom_call.1
$region0: #{tpu_custom_call.1}
  #allocation0 [shape = 'u32[]', space=smem, size = 0x4, offset = 0x4, fixed_abs, tag = 'smem constant byte address 0x4 - core index']
  #allocation1 [shape = 'u32[72,128]{1,0:T(1,128)}', space=vmem, size = 0x9000, scoped, tag = 'internal scratch']
  %s0 = inlined_call_operand.vmem [shape: f32[2,1024], index: 0, kind: input, shape index: {}]
  %s1 = inlined_call_operand.hbm [shape: f32[1024,128], index: 1, kind: input, shape index: {}]
  %s2 = inlined_call_operand.vmem [shape: f32[1,128], index: 2, kind: input, shape index: {}]
  %s3 = inlined_call_operand.vmem [shape: f32[128,32], index: 3, kind: input, shape index: {}]
  %s4 = inlined_call_operand.vmem [shape: f32[1,32], index: 4, kind: input, shape index: {}]
  %s5 = inlined_call_operand.vmem [shape: f32[32,4], index: 5, kind: input, shape index: {}]
  %s6 = inlined_call_operand.vmem [shape: f32[1,4], index: 6, kind: input, shape index: {}]
  %s7 = inlined_call_operand.hbm [shape: f32[2,4], index: 7, kind: output, shape index: {}]
  %s8 = sld [smem:[#allocation0]]
  $region42: #{tpu_custom_call.1} parent=0
    _
  %s10 = ssub.s32 1, %s8
  %s11 = scalar_select 0, %s10, %s8
  $region1: #{tpu_custom_call.1} parent=0
    #allocation2 [shape = 'u8[524288]{0}', space=vmem, size = 0x80000, scoped, tag = 'input window, operand 1, single buffered']
    #allocation3 [shape = 's32[1]{0}', space=sflag, size = 0x4, scoped, tag = 'scoped memory for tpu_custom_call.1']
    #allocation4 [shape = 's32[1]{0}', space=sflag, size = 0x4, scoped, tag = 'scoped memory for tpu_custom_call.1']
    #allocation5 [shape = 'u8[1024]{0}', space=vmem, size = 0x400, scoped, tag = 'output window, operand 0, single buffered']
    %12 = vsyncpa [#allocation3], 0
    %13 = vsyncpa [#allocation4], 0
    // Predicated region
    $region2: #{tpu_custom_call.1} parent=1 // pred_check
      _
    $region3: #{tpu_custom_call.1} parent=1 // pred_check_branch
      %15 = sbr.rel (0) target = $region5
    $region4: #{tpu_custom_call.1} parent=1 // pred_region
      _
    $region5: #{tpu_custom_call.1} parent=1 // pred_fallthru
      _
    // Predicated region
    $region6: #{tpu_custom_call.1} parent=1 // pred_check
      _
    $region7: #{tpu_custom_call.1} parent=1 // pred_check_branch
      %17 = sbr.rel (0) target = $region9
    $region8: #{tpu_custom_call.1} parent=1 // pred_region
      %19 = vsyncadd [#allocation3], 0
      %s20 = sshll.u32 %s1, 4
      %s21 = int_to_ptr.hbm [resolvable:$true] %s20
      %s22 = sshll.u32 [#allocation2], 4
      %s23 = int_to_ptr.vmem [resolvable:$true] %s22
      %28 = dma.hbm_to_vmem [thread:$0]  %s21, 16384, %s23, [#allocation3], 128, 128, 8
    $region9: #{tpu_custom_call.1} parent=1 // pred_fallthru
      _
    // Predicated region
    $region10: #{tpu_custom_call.1} parent=1 // pred_check
      _
    $region11: #{tpu_custom_call.1} parent=1 // pred_check_branch
      %30 = sbr.rel (0) target = $region13
    $region12: #{tpu_custom_call.1} parent=1 // pred_region
      _
    $region13: #{tpu_custom_call.1} parent=1 // pred_fallthru
      _
    // Predicated region
    $region14: #{tpu_custom_call.1} parent=1 // pred_check
      _
    $region15: #{tpu_custom_call.1} parent=1 // pred_check_branch
      %32 = sbr.rel (0) target = $region17
    $region16: #{tpu_custom_call.1} parent=1 // pred_region
      _
    $region17: #{tpu_custom_call.1} parent=1 // pred_fallthru
      _
    // Predicated region
    $region18: #{tpu_custom_call.1} parent=1 // pred_check
      _
    $region19: #{tpu_custom_call.1} parent=1 // pred_check_branch
      %34 = sbr.rel (0) target = $region21
    $region20: #{tpu_custom_call.1} parent=1 // pred_region
      _
    $region21: #{tpu_custom_call.1} parent=1 // pred_fallthru
      _
    // Predicated region
    $region22: #{tpu_custom_call.1} parent=1 // pred_check
      _
    $region23: #{tpu_custom_call.1} parent=1 // pred_check_branch
      %36 = sbr.rel (0) target = $region25
    $region24: #{tpu_custom_call.1} parent=1 // pred_region
      _
    $region25: #{tpu_custom_call.1} parent=1 // pred_fallthru
      _
    // Predicated region
    $region26: #{tpu_custom_call.1} parent=1 // pred_check
      _
    $region27: #{tpu_custom_call.1} parent=1 // pred_check_branch
      %38 = sbr.rel (0) target = $region29
    $region28: #{tpu_custom_call.1} parent=1 // pred_region
      _
    $region29: #{tpu_custom_call.1} parent=1 // pred_fallthru
      _
    // Predicated region
    $region30: #{tpu_custom_call.1} parent=1 // pred_check
      _
    $region31: #{tpu_custom_call.1} parent=1 // pred_check_branch
      %40 = sbr.rel (0) target = $region33
    $region32: #{tpu_custom_call.1} parent=1 // pred_region
      %42 = dma.done [#allocation3], 16384
    $region33: #{tpu_custom_call.1} parent=1 // pred_fallthru
      _
    %v43 = vld [vmem:[%s0] sm:$0xff]
    %v44 = vld [vmem:[%s0 + $0x8] sm:$0xff]
    %v45 = vld [vmem:[#allocation2] sm:$0xff]
    %v46 = vld [vmem:[#allocation2 + $0x8] sm:$0xff]
    %v47 = vld [vmem:[#allocation2 + $0x10] sm:$0xff]
    %v48 = vld [vmem:[#allocation2 + $0x18] sm:$0xff]
    %v49 = vld [vmem:[#allocation2 + $0x20] sm:$0xff]
    %v50 = vld [vmem:[#allocation2 + $0x28] sm:$0xff]
    %v51 = vld [vmem:[#allocation2 + $0x30] sm:$0xff]
    %v52 = vld [vmem:[#allocation2 + $0x38] sm:$0xff]
    %v53 = vld [vmem:[#allocation2 + $0x40] sm:$0xff]
    %v54 = vld [vmem:[#allocation2 + $0x48] sm:$0xff]
    %v55 = vld [vmem:[#allocation2 + $0x50] sm:$0xff]
    %v56 = vld [vmem:[#allocation2 + $0x58] sm:$0xff]
    %v57 = vld [vmem:[#allocation2 + $0x60] sm:$0xff]
    %v58 = vld [vmem:[#allocation2 + $0x68] sm:$0xff]
    %v59 = vld [vmem:[#allocation2 + $0x70] sm:$0xff]
    %v60 = vld [vmem:[#allocation2 + $0x78] sm:$0xff]
    %v61 = vld [vmem:[#allocation2 + $0x80] sm:$0xff]
    %v62 = vld [vmem:[#allocation2 + $0x88] sm:$0xff]
    %v63 = vld [vmem:[#allocation2 + $0x90] sm:$0xff]
    %v64 = vld [vmem:[#allocation2 + $0x98] sm:$0xff]
    %v65 = vld [vmem:[#allocation2 + $0xa0] sm:$0xff]
    %v66 = vld [vmem:[#allocation2 + $0xa8] sm:$0xff]
    %v67 = vld [vmem:[#allocation2 + $0xb0] sm:$0xff]
    %v68 = vld [vmem:[#allocation2 + $0xb8] sm:$0xff]
    %v69 = vld [vmem:[#allocation2 + $0xc0] sm:$0xff]
    %v70 = vld [vmem:[#allocation2 + $0xc8] sm:$0xff]
    %v71 = vld [vmem:[#allocation2 + $0xd0] sm:$0xff]
    %v72 = vld [vmem:[#allocation2 + $0xd8] sm:$0xff]
    %v73 = vld [vmem:[#allocation2 + $0xe0] sm:$0xff]
    %v74 = vld [vmem:[#allocation2 + $0xe8] sm:$0xff]
    %v75 = vld [vmem:[#allocation2 + $0xf0] sm:$0xff]
    %v76 = vld [vmem:[#allocation2 + $0xf8] sm:$0xff]
    %v77 = vld [vmem:[#allocation2 + $0x100] sm:$0xff]
    %v78 = vld [vmem:[#allocation2 + $0x108] sm:$0xff]
    %v79 = vld [vmem:[#allocation2 + $0x110] sm:$0xff]
    %v80 = vld [vmem:[#allocation2 + $0x118] sm:$0xff]
    %v81 = vld [vmem:[#allocation2 + $0x120] sm:$0xff]
    %v82 = vld [vmem:[#allocation2 + $0x128] sm:$0xff]
    %v83 = vld [vmem:[#allocation2 + $0x130] sm:$0xff]
    %v84 = vld [vmem:[#allocation2 + $0x138] sm:$0xff]
    %v85 = vld [vmem:[#allocation2 + $0x140] sm:$0xff]
    %v86 = vld [vmem:[#allocation2 + $0x148] sm:$0xff]
    %v87 = vld [vmem:[#allocation2 + $0x150] sm:$0xff]
    %v88 = vld [vmem:[#allocation2 + $0x158] sm:$0xff]
    %v89 = vld [vmem:[#allocation2 + $0x160] sm:$0xff]
    %v90 = vld [vmem:[#allocation2 + $0x168] sm:$0xff]
    %v91 = vld [vmem:[#allocation2 + $0x170] sm:$0xff]
    %v92 = vld [vmem:[#allocation2 + $0x178] sm:$0xff]
    %v93 = vld [vmem:[#allocation2 + $0x180] sm:$0xff]
    %v94 = vld [vmem:[#allocation2 + $0x188] sm:$0xff]
    %v95 = vld [vmem:[#allocation2 + $0x190] sm:$0xff]
    %v96 = vld [vmem:[#allocation2 + $0x198] sm:$0xff]
    %v97 = vld [vmem:[#allocation2 + $0x1a0] sm:$0xff]
    %v98 = vld [vmem:[#allocation2 + $0x1a8] sm:$0xff]
    %v99 = vld [vmem:[#allocation2 + $0x1b0] sm:$0xff]
    %v100 = vld [vmem:[#allocation2 + $0x1b8] sm:$0xff]
    %v101 = vld [vmem:[#allocation2 + $0x1c0] sm:$0xff]
    %v102 = vld [vmem:[#allocation2 + $0x1c8] sm:$0xff]
    %v103 = vld [vmem:[#allocation2 + $0x1d0] sm:$0xff]
    %v104 = vld [vmem:[#allocation2 + $0x1d8] sm:$0xff]
    %v105 = vld [vmem:[#allocation2 + $0x1e0] sm:$0xff]
    %v106 = vld [vmem:[#allocation2 + $0x1e8] sm:$0xff]
    %v107 = vld [vmem:[#allocation2 + $0x1f0] sm:$0xff]
    %v108 = vld [vmem:[#allocation2 + $0x1f8] sm:$0xff]
    %v109 = vld [vmem:[#allocation2 + $0x200] sm:$0xff]
    %v110 = vld [vmem:[#allocation2 + $0x208] sm:$0xff]
    %v111 = vld [vmem:[#allocation2 + $0x210] sm:$0xff]
    %v112 = vld [vmem:[#allocation2 + $0x218] sm:$0xff]
    %v113 = vld [vmem:[#allocation2 + $0x220] sm:$0xff]
    %v114 = vld [vmem:[#allocation2 + $0x228] sm:$0xff]
    %v115 = vld [vmem:[#allocation2 + $0x230] sm:$0xff]
    %v116 = vld [vmem:[#allocation2 + $0x238] sm:$0xff]
    %v117 = vld [vmem:[#allocation2 + $0x240] sm:$0xff]
    %v118 = vld [vmem:[#allocation2 + $0x248] sm:$0xff]
    %v119 = vld [vmem:[#allocation2 + $0x250] sm:$0xff]
    %v120 = vld [vmem:[#allocation2 + $0x258] sm:$0xff]
    %v121 = vld [vmem:[#allocation2 + $0x260] sm:$0xff]
    %v122 = vld [vmem:[#allocation2 + $0x268] sm:$0xff]
    %v123 = vld [vmem:[#allocation2 + $0x270] sm:$0xff]
    %v124 = vld [vmem:[#allocation2 + $0x278] sm:$0xff]
    %v125 = vld [vmem:[#allocation2 + $0x280] sm:$0xff]
    %v126 = vld [vmem:[#allocation2 + $0x288] sm:$0xff]
    %v127 = vld [vmem:[#allocation2 + $0x290] sm:$0xff]
    %v128 = vld [vmem:[#allocation2 + $0x298] sm:$0xff]
    %v129 = vld [vmem:[#allocation2 + $0x2a0] sm:$0xff]
    %v130 = vld [vmem:[#allocation2 + $0x2a8] sm:$0xff]
    %v131 = vld [vmem:[#allocation2 + $0x2b0] sm:$0xff]
    %v132 = vld [vmem:[#allocation2 + $0x2b8] sm:$0xff]
    %v133 = vld [vmem:[#allocation2 + $0x2c0] sm:$0xff]
    %v134 = vld [vmem:[#allocation2 + $0x2c8] sm:$0xff]
    %v135 = vld [vmem:[#allocation2 + $0x2d0] sm:$0xff]
    %v136 = vld [vmem:[#allocation2 + $0x2d8] sm:$0xff]
    %v137 = vld [vmem:[#allocation2 + $0x2e0] sm:$0xff]
    %v138 = vld [vmem:[#allocation2 + $0x2e8] sm:$0xff]
    %v139 = vld [vmem:[#allocation2 + $0x2f0] sm:$0xff]
    %v140 = vld [vmem:[#allocation2 + $0x2f8] sm:$0xff]
    %v141 = vld [vmem:[#allocation2 + $0x300] sm:$0xff]
    %v142 = vld [vmem:[#allocation2 + $0x308] sm:$0xff]
    %v143 = vld [vmem:[#allocation2 + $0x310] sm:$0xff]
    %v144 = vld [vmem:[#allocation2 + $0x318] sm:$0xff]
    %v145 = vld [vmem:[#allocation2 + $0x320] sm:$0xff]
    %v146 = vld [vmem:[#allocation2 + $0x328] sm:$0xff]
    %v147 = vld [vmem:[#allocation2 + $0x330] sm:$0xff]
    %v148 = vld [vmem:[#allocation2 + $0x338] sm:$0xff]
    %v149 = vld [vmem:[#allocation2 + $0x340] sm:$0xff]
    %v150 = vld [vmem:[#allocation2 + $0x348] sm:$0xff]
    %v151 = vld [vmem:[#allocation2 + $0x350] sm:$0xff]
    %v152 = vld [vmem:[#allocation2 + $0x358] sm:$0xff]
    %v153 = vld [vmem:[#allocation2 + $0x360] sm:$0xff]
    %v154 = vld [vmem:[#allocation2 + $0x368] sm:$0xff]
    %v155 = vld [vmem:[#allocation2 + $0x370] sm:$0xff]
    %v156 = vld [vmem:[#allocation2 + $0x378] sm:$0xff]
    %v157 = vld [vmem:[#allocation2 + $0x380] sm:$0xff]
    %v158 = vld [vmem:[#allocation2 + $0x388] sm:$0xff]
    %v159 = vld [vmem:[#allocation2 + $0x390] sm:$0xff]
    %v160 = vld [vmem:[#allocation2 + $0x398] sm:$0xff]
    %v161 = vld [vmem:[#allocation2 + $0x3a0] sm:$0xff]
    %v162 = vld [vmem:[#allocation2 + $0x3a8] sm:$0xff]
    %v163 = vld [vmem:[#allocation2 + $0x3b0] sm:$0xff]
    %v164 = vld [vmem:[#allocation2 + $0x3b8] sm:$0xff]
    %v165 = vld [vmem:[#allocation2 + $0x3c0] sm:$0xff]
    %v166 = vld [vmem:[#allocation2 + $0x3c8] sm:$0xff]
    %v167 = vld [vmem:[#allocation2 + $0x3d0] sm:$0xff]
    %v168 = vld [vmem:[#allocation2 + $0x3d8] sm:$0xff]
    %v169 = vld [vmem:[#allocation2 + $0x3e0] sm:$0xff]
    %v170 = vld [vmem:[#allocation2 + $0x3e8] sm:$0xff]
    %v171 = vld [vmem:[#allocation2 + $0x3f0] sm:$0xff]
    %v172 = vld [vmem:[#allocation2 + $0x3f8] sm:$0xff]
    %v173 = vld [vmem:[%s2] sm:$0x1]
    %v175 = vperm.slane %v173, 0
    %179 = vst [vmem:[#allocation1] ss:$4 sm:$0xff] %v43
    %s180 = scalar_lea.vmem [#allocation1], 32
    %181 = vst [vmem:[%s180] ss:$4 sm:$0xff] %v44
    %v182 = vld.sshfl [vmem:[#allocation1] sm:$0xff pattern:$0x73625140]
    %v183 = vld.sshfl [vmem:[#allocation1 + $0x8] sm:$0xff pattern:$0x73625140]
    %v184 = vld.sshfl [vmem:[#allocation1 + $0x10] sm:$0xff pattern:$0x73625140]
    %v185 = vld.sshfl [vmem:[#allocation1 + $0x18] sm:$0xff pattern:$0x73625140]
    %v186 = vld.sshfl [vmem:[#allocation1 + $0x20] sm:$0xff pattern:$0x73625140]
    %v187 = vld.sshfl [vmem:[#allocation1 + $0x28] sm:$0xff pattern:$0x73625140]
    %v188 = vld.sshfl [vmem:[#allocation1 + $0x30] sm:$0xff pattern:$0x73625140]
    %v189 = vld.sshfl [vmem:[#allocation1 + $0x38] sm:$0xff pattern:$0x73625140]
    %198 = vmatpush.msra.mxu0 %v60
    %199 = vmatpush.msra.mxu0 %v59
    %200 = vmatpush.msra.mxu0 %v58
    %201 = vmatpush.msra.mxu0 %v57
    %202 = vmatpush.msra.mxu0 %v56
    %203 = vmatpush.msra.mxu0 %v55
    %204 = vmatpush.msra.mxu0 %v54
    %205 = vmatpush.msra.mxu0 %v53
    %206 = vmatpush.msra.mxu0 %v52
    %207 = vmatpush.msra.mxu0 %v51
    %208 = vmatpush.msra.mxu0 %v50
    %209 = vmatpush.msra.mxu0 %v49
    %210 = vmatpush.msra.mxu0 %v48
    %211 = vmatpush.msra.mxu0 %v47
    %212 = vmatpush.msra.mxu0 %v46
    %213 = vmatpush.msra.mxu0 %v45
    %214 = vmatmul.f32.gmra.mxu0 %v182
    %v215 = vpop.f32.mrf.mxu0
    %v216 = vadd.f32 %v175, %v215
    %217 = vdwg.mxu0
    %218 = vmatpush.msra.mxu0 %v76
    %219 = vmatpush.msra.mxu0 %v75
    %220 = vmatpush.msra.mxu0 %v74
    %221 = vmatpush.msra.mxu0 %v73
    %222 = vmatpush.msra.mxu0 %v72
    %223 = vmatpush.msra.mxu0 %v71
    %224 = vmatpush.msra.mxu0 %v70
    %225 = vmatpush.msra.mxu0 %v69
    %226 = vmatpush.msra.mxu0 %v68
    %227 = vmatpush.msra.mxu0 %v67
    %228 = vmatpush.msra.mxu0 %v66
    %229 = vmatpush.msra.mxu0 %v65
    %230 = vmatpush.msra.mxu0 %v64
    %231 = vmatpush.msra.mxu0 %v63
    %232 = vmatpush.msra.mxu0 %v62
    %233 = vmatpush.msra.mxu0 %v61
    %234 = vmatmul.f32.gmra.mxu0 %v183
    %v235 = vpop.f32.mrf.mxu0
    %v236 = vadd.f32 %v216, %v235
    %237 = vdwg.mxu0
    %238 = vmatpush.msra.mxu0 %v92
    %239 = vmatpush.msra.mxu0 %v91
    %240 = vmatpush.msra.mxu0 %v90
    %241 = vmatpush.msra.mxu0 %v89
    %242 = vmatpush.msra.mxu0 %v88
    %243 = vmatpush.msra.mxu0 %v87
    %244 = vmatpush.msra.mxu0 %v86
    %245 = vmatpush.msra.mxu0 %v85
    %246 = vmatpush.msra.mxu0 %v84
    %247 = vmatpush.msra.mxu0 %v83
    %248 = vmatpush.msra.mxu0 %v82
    %249 = vmatpush.msra.mxu0 %v81
    %250 = vmatpush.msra.mxu0 %v80
    %251 = vmatpush.msra.mxu0 %v79
    %252 = vmatpush.msra.mxu0 %v78
    %253 = vmatpush.msra.mxu0 %v77
    %254 = vmatmul.f32.gmra.mxu0 %v184
    %v255 = vpop.f32.mrf.mxu0
    %v256 = vadd.f32 %v236, %v255
    %257 = vdwg.mxu0
    %258 = vmatpush.msra.mxu0 %v108
    %259 = vmatpush.msra.mxu0 %v107
    %260 = vmatpush.msra.mxu0 %v106
    %261 = vmatpush.msra.mxu0 %v105
    %262 = vmatpush.msra.mxu0 %v104
    %263 = vmatpush.msra.mxu0 %v103
    %264 = vmatpush.msra.mxu0 %v102
    %265 = vmatpush.msra.mxu0 %v101
    %266 = vmatpush.msra.mxu0 %v100
    %267 = vmatpush.msra.mxu0 %v99
    %268 = vmatpush.msra.mxu0 %v98
    %269 = vmatpush.msra.mxu0 %v97
    %270 = vmatpush.msra.mxu0 %v96
    %271 = vmatpush.msra.mxu0 %v95
    %272 = vmatpush.msra.mxu0 %v94
    %273 = vmatpush.msra.mxu0 %v93
    %274 = vmatmul.f32.gmra.mxu0 %v185
    %v275 = vpop.f32.mrf.mxu0
    %v276 = vadd.f32 %v256, %v275
    %277 = vdwg.mxu0
    %278 = vmatpush.msra.mxu0 %v124
    %279 = vmatpush.msra.mxu0 %v123
    %280 = vmatpush.msra.mxu0 %v122
    %281 = vmatpush.msra.mxu0 %v121
    %282 = vmatpush.msra.mxu0 %v120
    %283 = vmatpush.msra.mxu0 %v119
    %284 = vmatpush.msra.mxu0 %v118
    %285 = vmatpush.msra.mxu0 %v117
    %286 = vmatpush.msra.mxu0 %v116
    %287 = vmatpush.msra.mxu0 %v115
    %288 = vmatpush.msra.mxu0 %v114
    %289 = vmatpush.msra.mxu0 %v113
    %290 = vmatpush.msra.mxu0 %v112
    %291 = vmatpush.msra.mxu0 %v111
    %292 = vmatpush.msra.mxu0 %v110
    %293 = vmatpush.msra.mxu0 %v109
    %294 = vmatmul.f32.gmra.mxu0 %v186
    %v295 = vpop.f32.mrf.mxu0
    %v296 = vadd.f32 %v276, %v295
    %297 = vdwg.mxu0
    %298 = vmatpush.msra.mxu0 %v140
    %299 = vmatpush.msra.mxu0 %v139
    %300 = vmatpush.msra.mxu0 %v138
    %301 = vmatpush.msra.mxu0 %v137
    %302 = vmatpush.msra.mxu0 %v136
    %303 = vmatpush.msra.mxu0 %v135
    %304 = vmatpush.msra.mxu0 %v134
    %305 = vmatpush.msra.mxu0 %v133
    %306 = vmatpush.msra.mxu0 %v132
    %307 = vmatpush.msra.mxu0 %v131
    %308 = vmatpush.msra.mxu0 %v130
    %309 = vmatpush.msra.mxu0 %v129
    %310 = vmatpush.msra.mxu0 %v128
    %311 = vmatpush.msra.mxu0 %v127
    %312 = vmatpush.msra.mxu0 %v126
    %313 = vmatpush.msra.mxu0 %v125
    %314 = vmatmul.f32.gmra.mxu0 %v187
    %v315 = vpop.f32.mrf.mxu0
    %v316 = vadd.f32 %v296, %v315
    %317 = vdwg.mxu0
    %318 = vmatpush.msra.mxu0 %v156
    %319 = vmatpush.msra.mxu0 %v155
    %320 = vmatpush.msra.mxu0 %v154
    %321 = vmatpush.msra.mxu0 %v153
    %322 = vmatpush.msra.mxu0 %v152
    %323 = vmatpush.msra.mxu0 %v151
    %324 = vmatpush.msra.mxu0 %v150
    %325 = vmatpush.msra.mxu0 %v149
    %326 = vmatpush.msra.mxu0 %v148
    %327 = vmatpush.msra.mxu0 %v147
    %328 = vmatpush.msra.mxu0 %v146
    %329 = vmatpush.msra.mxu0 %v145
    %330 = vmatpush.msra.mxu0 %v144
    %331 = vmatpush.msra.mxu0 %v143
    %332 = vmatpush.msra.mxu0 %v142
    %333 = vmatpush.msra.mxu0 %v141
    %334 = vmatmul.f32.gmra.mxu0 %v188
    %v335 = vpop.f32.mrf.mxu0
    %v336 = vadd.f32 %v316, %v335
    %337 = vdwg.mxu0
    %338 = vmatpush.msra.mxu0 %v172
    %339 = vmatpush.msra.mxu0 %v171
    %340 = vmatpush.msra.mxu0 %v170
    %341 = vmatpush.msra.mxu0 %v169
    %342 = vmatpush.msra.mxu0 %v168
    %343 = vmatpush.msra.mxu0 %v167
    %344 = vmatpush.msra.mxu0 %v166
    %345 = vmatpush.msra.mxu0 %v165
    %346 = vmatpush.msra.mxu0 %v164
    %347 = vmatpush.msra.mxu0 %v163
    %348 = vmatpush.msra.mxu0 %v162
    %349 = vmatpush.msra.mxu0 %v161
    %350 = vmatpush.msra.mxu0 %v160
    %351 = vmatpush.msra.mxu0 %v159
    %352 = vmatpush.msra.mxu0 %v158
    %353 = vmatpush.msra.mxu0 %v157
    %354 = vmatmul.f32.gmra.mxu0 %v189
    %v355 = vpop.f32.mrf.mxu0
    %v356 = vadd.f32 %v336, %v355
    %357 = vdwg.mxu0
    %v358 = vmax.f32 %v356, 0.0
    %v359 = vld [vmem:[%s3] sm:$0xff]
    %v360 = vld [vmem:[%s3 + $0x8] sm:$0xff]
    %v361 = vld [vmem:[%s3 + $0x10] sm:$0xff]
    %v362 = vld [vmem:[%s3 + $0x18] sm:$0xff]
    %v363 = vld [vmem:[%s3 + $0x20] sm:$0xff]
    %v364 = vld [vmem:[%s3 + $0x28] sm:$0xff]
    %v365 = vld [vmem:[%s3 + $0x30] sm:$0xff]
    %v366 = vld [vmem:[%s3 + $0x38] sm:$0xff]
    %v367 = vld [vmem:[%s3 + $0x40] sm:$0xff]
    %v368 = vld [vmem:[%s3 + $0x48] sm:$0xff]
    %v369 = vld [vmem:[%s3 + $0x50] sm:$0xff]
    %v370 = vld [vmem:[%s3 + $0x58] sm:$0xff]
    %v371 = vld [vmem:[%s3 + $0x60] sm:$0xff]
    %v372 = vld [vmem:[%s3 + $0x68] sm:$0xff]
    %v373 = vld [vmem:[%s3 + $0x70] sm:$0xff]
    %v374 = vld [vmem:[%s3 + $0x78] sm:$0xff]
    %v375 = vld [vmem:[%s4] sm:$0x1]
    %v377 = vperm.slane %v375, 0
    %379 = vmatpush.msra.mxu0 %v374
    %380 = vmatpush.msra.mxu0 %v373
    %381 = vmatpush.msra.mxu0 %v372
    %382 = vmatpush.msra.mxu0 %v371
    %383 = vmatpush.msra.mxu0 %v370
    %384 = vmatpush.msra.mxu0 %v369
    %385 = vmatpush.msra.mxu0 %v368
    %386 = vmatpush.msra.mxu0 %v367
    %387 = vmatpush.msra.mxu0 %v366
    %388 = vmatpush.msra.mxu0 %v365
    %389 = vmatpush.msra.mxu0 %v364
    %390 = vmatpush.msra.mxu0 %v363
    %391 = vmatpush.msra.mxu0 %v362
    %392 = vmatpush.msra.mxu0 %v361
    %393 = vmatpush.msra.mxu0 %v360
    %394 = vmatpush.msra.mxu0 %v359
    %395 = vmatmul.f32.gmra.mxu0 %v358
    %v396 = vpop.f32.mrf.mxu0
    %v397 = vadd.f32 %v377, %v396
    %398 = vdwg.mxu0
    %v399 = vmax.f32 %v397, 0.0
    %v400 = vld [vmem:[%s5] sm:$0xff]
    %v401 = vld [vmem:[%s5 + $0x8] sm:$0xff]
    %v402 = vld [vmem:[%s5 + $0x10] sm:$0xff]
    %v403 = vld [vmem:[%s5 + $0x18] sm:$0xff]
    %v404 = vld [vmem:[%s6] sm:$0x1]
    %v406 = vperm.slane %v404, 0
    %vm408 = vcmask 261120
    %v410 = vsel %vm408, %v399, 0
    %412 = vmatpush.msra.mxu0 0.0
    %413 = vmatpush.msra.mxu0 0.0
    %414 = vmatpush.msra.mxu0 0.0
    %415 = vmatpush.msra.mxu0 0.0
    %416 = vmatpush.msra.mxu0 0.0
    %417 = vmatpush.msra.mxu0 0.0
    %418 = vmatpush.msra.mxu0 0.0
    %419 = vmatpush.msra.mxu0 0.0
    %420 = vmatpush.msra.mxu0 0.0
    %421 = vmatpush.msra.mxu0 0.0
    %422 = vmatpush.msra.mxu0 0.0
    %423 = vmatpush.msra.mxu0 0.0
    %424 = vmatpush.msra.mxu0 %v403
    %425 = vmatpush.msra.mxu0 %v402
    %426 = vmatpush.msra.mxu0 %v401
    %427 = vmatpush.msra.mxu0 %v400
    %428 = vmatmul.f32.gmra.mxu0 %v410
    %v429 = vpop.f32.mrf.mxu0
    %v430 = vadd.f32 %v406, %v429
    %431 = vdwg.mxu0
    %vm432 = vcmask 25600
    %433 = vst.msk [vmem:[#allocation5] sm:$0x3] %vm432, %v430
    // Predicated region
    $region34: #{tpu_custom_call.1} parent=1 // pred_check
      _
    $region35: #{tpu_custom_call.1} parent=1 // pred_check_branch
      %435 = sbr.rel (0) target = $region37
    $region36: #{tpu_custom_call.1} parent=1 // pred_region
      %437 = vsyncadd [#allocation4], 0
      %s439 = sshll.u32 [#allocation5], 4
      %s440 = int_to_ptr.vmem [resolvable:$true] %s439
      %s441 = sshll.u32 %s7, 4
      %s442 = int_to_ptr.hbm [resolvable:$true] %s441
      %444 = dma.vmem_to_hbm [thread:$0]  %s440, 32, %s442, [#allocation4]
    $region37: #{tpu_custom_call.1} parent=1 // pred_fallthru
      _
    // Predicated region
    $region38: #{tpu_custom_call.1} parent=1 // pred_check
      _
    $region39: #{tpu_custom_call.1} parent=1 // pred_check_branch
      %446 = sbr.rel (0) target = $region41
    $region40: #{tpu_custom_call.1} parent=1 // pred_region
      %448 = dma.done [#allocation4], 32
    $region41: #{tpu_custom_call.1} parent=1 // pred_fallthru
      _
    %449 = vsyncpa [#allocation3], 1
    %450 = vsyncpa [#allocation4], 1

</llo_original>
